<compile_context>
chip_gen: v7x
topology: tpu7x:2x2x1
jax: 0.10.0
libtpu: 0.0.40
codegen_flags: <defaults>
</compile_context>

<pallas_src>
import functools

import jax
import jax.numpy as jnp
from jax.experimental import pallas as pl
from jax.experimental.pallas import tpu as pltpu

LANES = 128
# Multi-lane-tile blocks are kept at a multiple of 32 sublanes (32*128 lanes)
# so both f32 (8,128) and int8 (32,128) tiling constraints are satisfied.
_BLOCK_LANE_QUANTUM = 32 * LANES


def _round_up(x, m):
    return (x + m - 1) // m * m


def _pick_block_hw(hw_pad, num_classes, logit_bytes, target_bytes,
                   vmem_budget_bytes, max_block_lanes):
    """Pick the spatial tile (in lanes) from a C-aware VMEM byte budget."""
    # Double-buffered inputs plus ~10 f32 (g_blk,128) temporaries per lane.
    per_lane = 2 * (num_classes * logit_bytes + target_bytes) + 10 * 4
    lanes = min(vmem_budget_bytes // per_lane, max_block_lanes)
    lanes = max((lanes // _BLOCK_LANE_QUANTUM) * _BLOCK_LANE_QUANTUM,
                _BLOCK_LANE_QUANTUM)
    if hw_pad <= lanes:
        return hw_pad          # single tile covers the whole spatial axis
    return lanes


def _focal_loss_kernel(logits_ref, target_ref, out_ref, *,
                       gamma, num_classes, hw):
    # logits_ref: (1, C, g_blk, 128)   target_ref: (1, 1, g_blk, 128) int8/int32
    # out_ref:    (1, 1, 1, 128) f32   (per-(batch, tile) partial sums)
    k = pl.program_id(1)
    g_blk = logits_ref.shape[2]
    block_hw = g_blk * LANES

    t = target_ref[0, 0].astype(jnp.int32)                  # (g_blk, 128)

    # Pass 1: running max over classes (re-read per class from VMEM; keeps
    # vreg pressure O(few) instead of holding the whole class stack live).
    m = logits_ref[0, 0].astype(jnp.float32)
    for c in range(1, num_classes):
        m = jnp.maximum(m, logits_ref[0, c].astype(jnp.float32))

    # Pass 2: fused sum-of-exp + target-class select.
    s = jnp.zeros_like(m)
    sel_shift = jnp.zeros_like(m)   # x_t - m
    sel_exp = jnp.zeros_like(m)     # exp(x_t - m)
    for c in range(num_classes):
        xc = logits_ref[0, c].astype(jnp.float32) - m
        e = jnp.exp(xc)
        s = s + e
        hit = t == c
        sel_shift = jnp.where(hit, xc, sel_shift)
        sel_exp = jnp.where(hit, e, sel_exp)

    logpt = sel_shift - jnp.log(s)                           # (g_blk, 128)
    pt = sel_exp * pl.reciprocal(s)        # reuse exp(x_t - m): no second exp

    one_minus_pt = 1.0 - pt
    if gamma == 2.0:
        focal = one_minus_pt * one_minus_pt                  # VPU mul, no pow
    elif gamma == 1.0:
        focal = one_minus_pt
    elif gamma == 0.0:
        focal = jnp.ones_like(one_minus_pt)
    else:
        focal = one_minus_pt ** gamma

    loss = -focal * logpt

    # Mask the ragged tail: positions >= true hw (128-lane pad region and/or
    # the partial last block's out-of-bounds garbage).
    sub = jax.lax.broadcasted_iota(jnp.int32, (g_blk, LANES), 0)
    lane = jax.lax.broadcasted_iota(jnp.int32, (g_blk, LANES), 1)
    pos = k * block_hw + sub * LANES + lane
    loss = jnp.where(pos < hw, loss, 0.0)

    # Per-tile reduction to a lane-dense (1,128) partial (XLU is otherwise idle).
    out_ref[...] = jnp.sum(loss, axis=0, keepdims=True).reshape(out_ref.shape)


def focal_loss(logits_nchw, target_nhw, *, gamma=2.0,
               vmem_budget_bytes=10 * 1024 * 1024, max_block_lanes=65536):
    """Matches FocalLoss(gamma, weight=None, reduction='mean').forward."""
    n, c, h, w = logits_nchw.shape
    hw = h * w
    m_true = n * hw

    hw_pad = _round_up(hw, LANES)
    logit_bytes = jnp.dtype(logits_nchw.dtype).itemsize
    tgt_dtype = jnp.int8 if c <= 127 else jnp.int32
    tgt_bytes = jnp.dtype(tgt_dtype).itemsize

    block_hw = _pick_block_hw(hw_pad, c, logit_bytes, tgt_bytes,
                              vmem_budget_bytes, max_block_lanes)
    g_total = hw_pad // LANES
    g_blk = block_hw // LANES
    num_tiles = pl.cdiv(g_total, g_blk)     # partial last block is masked

    logits = logits_nchw.reshape(n, c, hw)
    target = target_nhw.reshape(n, hw).astype(tgt_dtype)
    if hw_pad != hw:
        # Only a <128-lane pad so the 128-lane view is legal; the tail is
        # masked in-kernel (no reliance on pad values).
        pad = hw_pad - hw
        logits = jnp.pad(logits, ((0, 0), (0, 0), (0, pad)))
        target = jnp.pad(target, ((0, 0), (0, pad)))

    # Free views of contiguous memory (last-dim split only, no transpose).
    logits = logits.reshape(n, c, g_total, LANES)
    target = target.reshape(n, 1, g_total, LANES)

    kernel = functools.partial(
        _focal_loss_kernel, gamma=float(gamma), num_classes=c, hw=hw)

    partials = pl.pallas_call(
        kernel,
        out_shape=jax.ShapeDtypeStruct((n, num_tiles, 1, LANES), jnp.float32),
        grid_spec=pltpu.PrefetchScalarGridSpec(
            num_scalar_prefetch=0,
            grid=(n, num_tiles),
            in_specs=[
                pl.BlockSpec((1, c, g_blk, LANES), lambda i, k: (i, 0, k, 0)),
                pl.BlockSpec((1, 1, g_blk, LANES), lambda i, k: (i, 0, k, 0)),
            ],
            out_specs=pl.BlockSpec((1, 1, 1, LANES), lambda i, k: (i, k, 0, 0)),
        ),
        compiler_params=pltpu.CompilerParams(
            dimension_semantics=("parallel", "parallel")),
    )(logits, target)

    # Tiny lane-dense partials -> final mean outside the kernel.
    return jnp.sum(partials) / jnp.float32(m_true)


def _focal_loss_ref(logits_nchw, target_nhw, gamma=2.0):
    # Pure-JAX reference mirroring the PyTorch module.
    logp = jax.nn.log_softmax(logits_nchw.astype(jnp.float32), axis=1)
    p = jnp.exp(logp)
    t = target_nhw[:, None, :, :]
    logpt = jnp.take_along_axis(logp, t, axis=1)[:, 0]
    pt = jnp.take_along_axis(p, t, axis=1)[:, 0]
    loss = -((1.0 - pt) ** gamma) * logpt
    return loss.mean()


if __name__ == "__main__":
    key = jax.random.PRNGKey(0)
    k1, k2, k3, k4 = jax.random.split(key, 4)

    # Case 1: hw is a multiple of 128 (no padding path).
    N, C, H, W = 2, 4, 16, 16
    logits = jax.random.normal(k1, (N, C, H, W), dtype=jnp.float32)
    target = jax.random.randint(k2, (N, H, W), 0, C, dtype=jnp.int32)
    loss = jax.block_until_ready(focal_loss(logits, target, gamma=2.0))
    ref = _focal_loss_ref(logits, target, gamma=2.0)
    assert jnp.allclose(loss, ref, atol=1e-5, rtol=1e-5), (loss, ref)

    # Case 2: ragged hw (exercises the 128-lane pad + in-kernel iota mask).
    N2, C2, H2, W2 = 2, 6, 9, 10
    logits2 = jax.random.normal(k3, (N2, C2, H2, W2), dtype=jnp.float32)
    target2 = jax.random.randint(k4, (N2, H2, W2), 0, C2, dtype=jnp.int32)
    loss2 = jax.block_until_ready(focal_loss(logits2, target2, gamma=2.0))
    ref2 = _focal_loss_ref(logits2, target2, gamma=2.0)
    assert jnp.allclose(loss2, ref2, atol=1e-5, rtol=1e-5), (loss2, ref2)

    print("KERNEL_OK")
</pallas_src>

<mosaic_0001>
module attributes {stable_mosaic.version = 11 : i64} {
  func.func @_focal_loss_kernel(%arg0: i32, %arg1: i32, %arg2: memref<1x4x2x128xf32, #tpu.memory_space<vmem>>, %arg3: memref<1x1x2x128xi8, #tpu.memory_space<vmem>>, %arg4: memref<1x1x1x128xf32, #tpu.memory_space<vmem>>) attributes {dimension_semantics = [#tpu.dimension_semantics<parallel>, #tpu.dimension_semantics<parallel>], iteration_bounds = array<i64: 2, 1>, scalar_prefetch = 0 : i64, scratch_operands = 0 : i64, tpu.core_type = #tpu.core_type<tc>, window_params = [{transform_indices = @transform_0, window_bounds = array<i64: 1, 4, 2, 128>}, {transform_indices = @transform_1, window_bounds = array<i64: 1, 1, 2, 128>}, {transform_indices = @transform_2, window_bounds = array<i64: 1, 1, 1, 128>}]} {
    %c0 = arith.constant 0 : index
    %c0_0 = arith.constant 0 : index
    %c0_1 = arith.constant 0 : index
    %c0_2 = arith.constant 0 : index
    %0 = vector.load %arg3[%c0, %c0_0, %c0_1, %c0_2] : memref<1x1x2x128xi8, #tpu.memory_space<vmem>>, vector<1x1x2x128xi8>
    %1 = vector.shape_cast %0 : vector<1x1x2x128xi8> to vector<2x128xi8>
    %2 = arith.extsi %1 : vector<2x128xi8> to vector<2x128xi32>
    %c0_3 = arith.constant 0 : index
    %c0_4 = arith.constant 0 : index
    %c0_5 = arith.constant 0 : index
    %c0_6 = arith.constant 0 : index
    %3 = vector.load %arg2[%c0_3, %c0_4, %c0_5, %c0_6] : memref<1x4x2x128xf32, #tpu.memory_space<vmem>>, vector<1x1x2x128xf32>
    %4 = vector.shape_cast %3 : vector<1x1x2x128xf32> to vector<2x128xf32>
    %c0_7 = arith.constant 0 : index
    %c1 = arith.constant 1 : index
    %c0_8 = arith.constant 0 : index
    %c0_9 = arith.constant 0 : index
    %5 = vector.load %arg2[%c0_7, %c1, %c0_8, %c0_9] : memref<1x4x2x128xf32, #tpu.memory_space<vmem>>, vector<1x1x2x128xf32>
    %6 = vector.shape_cast %5 : vector<1x1x2x128xf32> to vector<2x128xf32>
    %7 = arith.maximumf %4, %6 : vector<2x128xf32>
    %c0_10 = arith.constant 0 : index
    %c2 = arith.constant 2 : index
    %c0_11 = arith.constant 0 : index
    %c0_12 = arith.constant 0 : index
    %8 = vector.load %arg2[%c0_10, %c2, %c0_11, %c0_12] : memref<1x4x2x128xf32, #tpu.memory_space<vmem>>, vector<1x1x2x128xf32>
    %9 = vector.shape_cast %8 : vector<1x1x2x128xf32> to vector<2x128xf32>
    %10 = arith.maximumf %7, %9 : vector<2x128xf32>
    %c0_13 = arith.constant 0 : index
    %c3 = arith.constant 3 : index
    %c0_14 = arith.constant 0 : index
    %c0_15 = arith.constant 0 : index
    %11 = vector.load %arg2[%c0_13, %c3, %c0_14, %c0_15] : memref<1x4x2x128xf32, #tpu.memory_space<vmem>>, vector<1x1x2x128xf32>
    %12 = vector.shape_cast %11 : vector<1x1x2x128xf32> to vector<2x128xf32>
    %13 = arith.maximumf %10, %12 : vector<2x128xf32>
    %cst = arith.constant 0.000000e+00 : f32
    %14 = vector.broadcast %cst : f32 to vector<2x128xf32>
    %cst_16 = arith.constant 0.000000e+00 : f32
    %15 = vector.broadcast %cst_16 : f32 to vector<2x128xf32>
    %cst_17 = arith.constant 0.000000e+00 : f32
    %16 = vector.broadcast %cst_17 : f32 to vector<2x128xf32>
    %c0_18 = arith.constant 0 : index
    %c0_19 = arith.constant 0 : index
    %c0_20 = arith.constant 0 : index
    %c0_21 = arith.constant 0 : index
    %17 = vector.load %arg2[%c0_18, %c0_19, %c0_20, %c0_21] : memref<1x4x2x128xf32, #tpu.memory_space<vmem>>, vector<1x1x2x128xf32>
    %18 = vector.shape_cast %17 : vector<1x1x2x128xf32> to vector<2x128xf32>
    %19 = arith.subf %18, %13 : vector<2x128xf32>
    %20 = math.exp %19 : vector<2x128xf32>
    %21 = arith.addf %14, %20 : vector<2x128xf32>
    %c0_i32 = arith.constant 0 : i32
    %22 = vector.broadcast %c0_i32 : i32 to vector<2x128xi32>
    %23 = arith.cmpi eq, %2, %22 : vector<2x128xi32>
    %24 = arith.select %23, %19, %15 : vector<2x128xi1>, vector<2x128xf32>
    %25 = arith.select %23, %20, %16 : vector<2x128xi1>, vector<2x128xf32>
    %c0_22 = arith.constant 0 : index
    %c1_23 = arith.constant 1 : index
    %c0_24 = arith.constant 0 : index
    %c0_25 = arith.constant 0 : index
    %26 = vector.load %arg2[%c0_22, %c1_23, %c0_24, %c0_25] : memref<1x4x2x128xf32, #tpu.memory_space<vmem>>, vector<1x1x2x128xf32>
    %27 = vector.shape_cast %26 : vector<1x1x2x128xf32> to vector<2x128xf32>
    %28 = arith.subf %27, %13 : vector<2x128xf32>
    %29 = math.exp %28 : vector<2x128xf32>
    %30 = arith.addf %21, %29 : vector<2x128xf32>
    %c1_i32 = arith.constant 1 : i32
    %31 = vector.broadcast %c1_i32 : i32 to vector<2x128xi32>
    %32 = arith.cmpi eq, %2, %31 : vector<2x128xi32>
    %33 = arith.select %32, %28, %24 : vector<2x128xi1>, vector<2x128xf32>
    %34 = arith.select %32, %29, %25 : vector<2x128xi1>, vector<2x128xf32>
    %c0_26 = arith.constant 0 : index
    %c2_27 = arith.constant 2 : index
    %c0_28 = arith.constant 0 : index
    %c0_29 = arith.constant 0 : index
    %35 = vector.load %arg2[%c0_26, %c2_27, %c0_28, %c0_29] : memref<1x4x2x128xf32, #tpu.memory_space<vmem>>, vector<1x1x2x128xf32>
    %36 = vector.shape_cast %35 : vector<1x1x2x128xf32> to vector<2x128xf32>
    %37 = arith.subf %36, %13 : vector<2x128xf32>
    %38 = math.exp %37 : vector<2x128xf32>
    %39 = arith.addf %30, %38 : vector<2x128xf32>
    %c2_i32 = arith.constant 2 : i32
    %40 = vector.broadcast %c2_i32 : i32 to vector<2x128xi32>
    %41 = arith.cmpi eq, %2, %40 : vector<2x128xi32>
    %42 = arith.select %41, %37, %33 : vector<2x128xi1>, vector<2x128xf32>
    %43 = arith.select %41, %38, %34 : vector<2x128xi1>, vector<2x128xf32>
    %c0_30 = arith.constant 0 : index
    %c3_31 = arith.constant 3 : index
    %c0_32 = arith.constant 0 : index
    %c0_33 = arith.constant 0 : index
    %44 = vector.load %arg2[%c0_30, %c3_31, %c0_32, %c0_33] : memref<1x4x2x128xf32, #tpu.memory_space<vmem>>, vector<1x1x2x128xf32>
    %45 = vector.shape_cast %44 : vector<1x1x2x128xf32> to vector<2x128xf32>
    %46 = arith.subf %45, %13 : vector<2x128xf32>
    %47 = math.exp %46 : vector<2x128xf32>
    %48 = arith.addf %39, %47 : vector<2x128xf32>
    %c3_i32 = arith.constant 3 : i32
    %49 = vector.broadcast %c3_i32 : i32 to vector<2x128xi32>
    %50 = arith.cmpi eq, %2, %49 : vector<2x128xi32>
    %51 = arith.select %50, %46, %42 : vector<2x128xi1>, vector<2x128xf32>
    %52 = arith.select %50, %47, %43 : vector<2x128xi1>, vector<2x128xf32>
    %53 = math.log %48 : vector<2x128xf32>
    %54 = arith.subf %51, %53 : vector<2x128xf32>
    %55 = tpu.reciprocal %48 : vector<2x128xf32> -> vector<2x128xf32>
    %56 = arith.mulf %52, %55 : vector<2x128xf32>
    %cst_34 = arith.constant 1.000000e+00 : f32
    %57 = vector.broadcast %cst_34 : f32 to vector<2x128xf32>
    %58 = arith.subf %57, %56 : vector<2x128xf32>
    %59 = arith.mulf %58, %58 : vector<2x128xf32>
    %cst_35 = arith.constant 0.000000e+00 : f32
    %60 = vector.broadcast %cst_35 : f32 to vector<2x128xf32>
    %61 = arith.subf %60, %59 : vector<2x128xf32>
    %62 = arith.mulf %61, %54 : vector<2x128xf32>
    %63 = tpu.iota {dimensions = array<i32: 0>} : vector<2x128xi32>
    %64 = tpu.iota {dimensions = array<i32: 1>} : vector<2x128xi32>
    %c256_i32 = arith.constant 256 : i32
    %65 = arith.muli %arg1, %c256_i32 : i32
    %c128_i32 = arith.constant 128 : i32
    %66 = vector.broadcast %c128_i32 : i32 to vector<2x128xi32>
    %67 = arith.muli %63, %66 : vector<2x128xi32>
    %68 = vector.broadcast %65 : i32 to vector<2x128xi32>
    %69 = arith.addi %68, %67 : vector<2x128xi32>
    %70 = arith.addi %69, %64 : vector<2x128xi32>
    %c256_i32_36 = arith.constant 256 : i32
    %71 = vector.broadcast %c256_i32_36 : i32 to vector<2x128xi32>
    %72 = arith.cmpi slt, %70, %71 : vector<2x128xi32>
    %cst_37 = arith.constant 0.000000e+00 : f32
    %73 = vector.broadcast %cst_37 : f32 to vector<2x128xf32>
    %74 = arith.select %72, %62, %73 : vector<2x128xi1>, vector<2x128xf32>
    %cst_38 = arith.constant dense<0.000000e+00> : vector<128xf32>
    %75 = vector.multi_reduction <add>, %74, %cst_38 [0] : vector<2x128xf32> to vector<128xf32>
    %76 = vector.shape_cast %75 : vector<128xf32> to vector<1x128xf32>
    %77 = vector.shape_cast %76 : vector<1x128xf32> to vector<1x1x1x128xf32>
    %c0_39 = arith.constant 0 : index
    %c0_40 = arith.constant 0 : index
    %c0_41 = arith.constant 0 : index
    %c0_42 = arith.constant 0 : index
    %78 = vector.load %arg4[%c0_39, %c0_40, %c0_41, %c0_42] : memref<1x1x1x128xf32, #tpu.memory_space<vmem>>, vector<1x1x1x128xf32>
    tpu.vector_store %arg4[%c0_39, %c0_40, %c0_41, %c0_42], %77 {strides = array<i32>} : memref<1x1x1x128xf32, #tpu.memory_space<vmem>>, vector<1x1x1x128xf32>,
    return
  }
  func.func @transform_0(%arg0: i32, %arg1: i32) -> (i32, i32, i32, i32) {
    %c0_i32 = arith.constant 0 : i32
    %c0_i32_0 = arith.constant 0 : i32
    %c0_i32_1 = arith.constant 0 : i32
    return %arg0, %c0_i32, %arg1, %c0_i32_0 : i32, i32, i32, i32
  }
  func.func @transform_1(%arg0: i32, %arg1: i32) -> (i32, i32, i32, i32) {
    %c0_i32 = arith.constant 0 : i32
    %c0_i32_0 = arith.constant 0 : i32
    %c0_i32_1 = arith.constant 0 : i32
    return %arg0, %c0_i32, %arg1, %c0_i32_0 : i32, i32, i32, i32
  }
  func.func @transform_2(%arg0: i32, %arg1: i32) -> (i32, i32, i32, i32) {
    %c0_i32 = arith.constant 0 : i32
    %c0_i32_0 = arith.constant 0 : i32
    %c0_i32_1 = arith.constant 0 : i32
    return %arg0, %arg1, %c0_i32, %c0_i32_0 : i32, i32, i32, i32
  }
}

</mosaic_0001>

<llo_original>
// kernel: tpu_custom_call.1
$region0: #{tpu_custom_call.1}
  #allocation0 [shape = 'u32[]', space=smem, size = 0x4, offset = 0x4, fixed_abs, tag = 'smem constant byte address 0x4 - core index']
  #allocation1 [shape = 'u32[144,128]{1,0:T(1,128)}', space=vmem, size = 0x12000, scoped, tag = 'internal scratch']
  %s0 = inlined_call_operand.hbm [shape: f32[2,4,2,128], index: 0, kind: input, shape index: {}]
  %s1 = inlined_call_operand.vmem [shape: s8[2,1,2,128], index: 1, kind: input, shape index: {}]
  %s2 = inlined_call_operand.hbm [shape: f32[2,1,1,128], index: 2, kind: output, shape index: {}]
  %s3 = sld [smem:[#allocation0]]
  $region45: #{tpu_custom_call.1} parent=0
    _
  %s5 = ssub.s32 1, %s3
  %s6 = scalar_select 0, %s5, %s3
  $region1: #{tpu_custom_call.1} parent=0
    #allocation2 [shape = 'u8[8192]{0}', space=vmem, size = 0x2000, scoped, tag = 'input window, operand 0']
    #allocation3 [shape = 's32[2]{0}', space=sflag, size = 0x8, scoped, tag = 'scoped memory for tpu_custom_call.1']
    #allocation4 [shape = 's32[2]{0}', space=sflag, size = 0x8, scoped, tag = 'scoped memory for tpu_custom_call.1']
    #allocation5 [shape = 'u8[1024]{0}', space=vmem, size = 0x400, scoped, tag = 'output window, operand 0']
    %7 = vsyncpa [#allocation3], 0
    %s8 = scalar_lea.sflag [#allocation3], 1
    %9 = vsyncpa %s8, 0
    %10 = vsyncpa [#allocation4], 0
    %s11 = scalar_lea.sflag [#allocation4], 1
    %12 = vsyncpa %s11, 0
    loop: start=0, step=1, limit=4
    $region2: #{tpu_custom_call.1} parent=1 // loop_pre_header
      _
    $region3: #{tpu_custom_call.1} parent=1 // loop_header
      %s14 = sphi 0, %s18
      %p15 = scmp.ge.s32.totalorder %s14, 4
      %s21 = sphi 0, %s33
      %s22 = sphi 0, %s29
      %s23 = sphi 0, %s21
      %s24 = sphi 0, %s22
      %s25 = sphi 0, %s23
      %s26 = sphi 0, %s24
      %s38 = sphi 0, %s40
      %s41 = sphi 0, %s38
      %s42 = sphi 0, %s41
      %s58 = sphi 0, %s42
      %s66 = sphi 0, %s68
      %s69 = sphi 0, %s66
      %s70 = sphi 0, %s69
      %s86 = sphi 0, %s70
      %s94 = sphi 0, %s96
      %s97 = sphi 0, %s94
      %s98 = sphi 0, %s97
      %s114 = sphi 0, %s98
    $region4: #{tpu_custom_call.1} parent=1 // loop_header_branch
      %17 = sbr.rel (%p15) target = $region8
    $region5: #{tpu_custom_call.1} parent=1 // loop_body
      %s19 = ssub.s32 %s14, 1
      %s20 = ssub.s32 %s14, 2
      %s27 = sadd.s32 1, %s22
      %p28 = scmp.ge.s32.totalorder %s27, 1
      %s29 = scalar_select %p28, 0, %s27
      %s30 = sadd.s32 1, %s21
      %s31 = scalar_select %p28, %s30, %s21
      %p32 = scmp.ge.s32.totalorder %s31, 2
      %s33 = scalar_select %p32, 0, %s31
      %s34 = ssub.s32 %s21, %s33
      %s35 = ssub.s32 %s22, %s29
      %s36 = sor.u32 %s34, %s35
      %p37 = scmp.eq.s32.totalorder %s36, 0
      %s39 = sadd.s32 %s38, 1
      %s40 = scalar_select %p37, %s38, %s39
      %p43 = pneg %p37
      %p44 = scmp.eq.s32.totalorder %s14, 1
      %p45 = por %p43, %p44
      %p46 = scmp.ne.s32.totalorder %s38, %s41
      %p47 = scmp.eq.s32.totalorder %s14, 0
      %p48 = por %p46, %p47
      %p49 = scmp.ne.s32.totalorder %s38, %s41
      %p50 = scmp.eq.s32.totalorder %s19, 1
      %p51 = por %p49, %p50
      %p52 = scmp.ne.s32.totalorder %s41, %s42
      %p53 = scmp.eq.s32.totalorder %s19, 0
      %p54 = por %p52, %p53
      %p55 = scmp.ne.s32.totalorder %s41, %s42
      %p56 = scmp.eq.s32.totalorder %s20, 1
      %p57 = por %p55, %p56
      %p59 = scmp.ne.s32.totalorder %s42, %s58
      %p60 = scmp.eq.s32.totalorder %s20, 0
      %p61 = por %p59, %p60
      %s62 = ssub.s32 %s21, %s33
      %s63 = ssub.s32 %s22, %s29
      %s64 = sor.u32 %s62, %s63
      %p65 = scmp.eq.s32.totalorder %s64, 0
      %s67 = sadd.s32 %s66, 1
      %s68 = scalar_select %p65, %s66, %s67
      %p71 = pneg %p65
      %p72 = scmp.eq.s32.totalorder %s14, 1
      %p73 = por %p71, %p72
      %p74 = scmp.ne.s32.totalorder %s66, %s69
      %p75 = scmp.eq.s32.totalorder %s14, 0
      %p76 = por %p74, %p75
      %p77 = scmp.ne.s32.totalorder %s66, %s69
      %p78 = scmp.eq.s32.totalorder %s19, 1
      %p79 = por %p77, %p78
      %p80 = scmp.ne.s32.totalorder %s69, %s70
      %p81 = scmp.eq.s32.totalorder %s19, 0
      %p82 = por %p80, %p81
      %p83 = scmp.ne.s32.totalorder %s69, %s70
      %p84 = scmp.eq.s32.totalorder %s20, 1
      %p85 = por %p83, %p84
      %p87 = scmp.ne.s32.totalorder %s70, %s86
      %p88 = scmp.eq.s32.totalorder %s20, 0
      %p89 = por %p87, %p88
      %s90 = ssub.s32 %s21, %s33
      %s91 = ssub.s32 %s22, %s29
      %s92 = sor.u32 %s90, %s91
      %p93 = scmp.eq.s32.totalorder %s92, 0
      %s95 = sadd.s32 %s94, 1
      %s96 = scalar_select %p93, %s94, %s95
      %p99 = pneg %p93
      %p100 = scmp.eq.s32.totalorder %s14, 1
      %p101 = por %p99, %p100
      %p102 = scmp.ne.s32.totalorder %s94, %s97
      %p103 = scmp.eq.s32.totalorder %s14, 0
      %p104 = por %p102, %p103
      %p105 = scmp.ne.s32.totalorder %s94, %s97
      %p106 = scmp.eq.s32.totalorder %s19, 1
      %p107 = por %p105, %p106
      %p108 = scmp.ne.s32.totalorder %s97, %s98
      %p109 = scmp.eq.s32.totalorder %s19, 0
      %p110 = por %p108, %p109
      %p111 = scmp.ne.s32.totalorder %s97, %s98
      %p112 = scmp.eq.s32.totalorder %s20, 1
      %p113 = por %p111, %p112
      %p115 = scmp.ne.s32.totalorder %s98, %s114
      %p116 = scmp.eq.s32.totalorder %s20, 0
      %p117 = por %p115, %p116
      %p118 = scmp.le.s32.totalorder 1, %s14
      %p119 = scmp.lt.s32.totalorder %s14, 3
      %p120 = pnand %p118, %p119
      %p121 = pneg %p120
      // Predicated region
      $region9: #{tpu_custom_call.1} parent=5 // pred_check
        _
      $region10: #{tpu_custom_call.1} parent=5 // pred_check_branch
        %123 = sbr.rel (%p120) target = $region12
      $region11: #{tpu_custom_call.1} parent=5 // pred_region
        %s124 = ssub.s32 %s14, 1
      $region12: #{tpu_custom_call.1} parent=5 // pred_fallthru
        _
      %p125 = scmp.lt.s32.totalorder %s14, 2
      // Predicated region
      $region13: #{tpu_custom_call.1} parent=5 // pred_check
        %p126 = pneg %p125
      $region14: #{tpu_custom_call.1} parent=5 // pred_check_branch
        %128 = sbr.rel (%p126) target = $region16
      $region15: #{tpu_custom_call.1} parent=5 // pred_region
        // Predicated region
        $region17: #{tpu_custom_call.1} parent=15 // pred_check
          %p129 = pneg %p48
        $region18: #{tpu_custom_call.1} parent=15 // pred_check_branch
          %131 = sbr.rel (%p129) target = $region20
        $region19: #{tpu_custom_call.1} parent=15 // pred_region
          %s132 = sand.u32 %s38, 1
          %s133 = scalar_lea.sflag [#allocation3], %s132
          %s134 = sand.u32 %s38, 1
          %s135 = smul.addr %s134, 8
          %s136 = scalar_lea.vmem [#allocation2], %s135
          %s138 = ssub.s32 128, 128
          %139 = vsyncadd %s133, %s138
          %s140 = smul.addr %s21, 4
          %s141 = sadd.s32 %s22, %s140
          %s142 = smul.addr %s141, 32
          %s143 = scalar_lea.hbm %s0, %s142
          %s144 = sshll.u32 %s136, 4
          %s145 = int_to_ptr.vmem [resolvable:$true] %s144
          %150 = dma.hbm_to_vmem [thread:$0]  %s143, 128, %s145, %s133, 32, 32, 2
        $region20: #{tpu_custom_call.1} parent=15 // pred_fallthru
          _
        // Predicated region
        $region21: #{tpu_custom_call.1} parent=15 // pred_check
          %p151 = pneg %p76
        $region22: #{tpu_custom_call.1} parent=15 // pred_check_branch
          %153 = sbr.rel (%p151) target = $region24
        $region23: #{tpu_custom_call.1} parent=15 // pred_region
          %p154 = scmp.lt.s32.totalorder %s21, 1
          %s155 = scalar_select %p154, %s21, 1
          %p156 = scmp.lt.s32.totalorder %s22, 0
          %s157 = scalar_select %p156, %s22, 0
          %s158 = sadd.s32 %s157, %s155
          %s159 = scalar_lea.vmem %s1, %s158
        $region24: #{tpu_custom_call.1} parent=15 // pred_fallthru
          _
      $region16: #{tpu_custom_call.1} parent=5 // pred_fallthru
        _
      %p160 = scmp.le.s32.totalorder 1, %s14
      %p161 = scmp.lt.s32.totalorder %s14, 3
      %p162 = pnand %p160, %p161
      %p163 = pneg %p162
      // Predicated region
      $region25: #{tpu_custom_call.1} parent=5 // pred_check
        _
      $region26: #{tpu_custom_call.1} parent=5 // pred_check_branch
        %165 = sbr.rel (%p162) target = $region28
      $region27: #{tpu_custom_call.1} parent=5 // pred_region
        %s166 = ssub.s32 %s14, 1
        %s167 = sand.u32 %s41, 1
        %s168 = scalar_lea.sflag [#allocation3], %s167
        %s169 = sand.u32 %s41, 1
        %s170 = smul.addr %s169, 8
        %s171 = scalar_lea.vmem [#allocation2], %s170
        // Predicated region
        $region29: #{tpu_custom_call.1} parent=27 // pred_check
          %p172 = pneg %p54
        $region30: #{tpu_custom_call.1} parent=27 // pred_check_branch
          %174 = sbr.rel (%p172) target = $region32
        $region31: #{tpu_custom_call.1} parent=27 // pred_region
          %175 = dma.done %s168, 128
        $region32: #{tpu_custom_call.1} parent=27 // pred_fallthru
          _
        %s176 = sand.u32 %s41, 1
        %s177 = scalar_lea.sflag [#allocation3], %s176
        %s178 = sand.u32 %s41, 1
        %s179 = smul.addr %s178, 8
        %s180 = scalar_lea.vmem [#allocation2], %s179
        %p181 = pneg %p54
        %p182 = pneg %p51
        %p183 = scmp.lt.s32.totalorder %s23, 1
        %s184 = scalar_select %p183, %s23, 1
        %p185 = scmp.lt.s32.totalorder %s24, 0
        %s186 = scalar_select %p185, %s24, 0
        %s187 = sadd.s32 %s186, %s184
        %s188 = scalar_lea.vmem %s1, %s187
        %p189 = pneg %p82
        %p190 = pneg %p79
        %p191 = pneg %p110
        %p192 = pneg %p107
        %s193 = sand.u32 %s97, 1
        %s194 = scalar_lea.sflag [#allocation4], %s193
        %s195 = sand.u32 %s97, 1
        %s196 = scalar_lea.vmem [#allocation5], %s195
        %p197 = scmp.lt.s32.totalorder %s23, 1
        %s198 = scalar_select %p197, %s23, 1
        %p199 = scmp.lt.s32.totalorder %s24, 0
        %s200 = scalar_select %p199, %s24, 0
        %s201 = sadd.s32 %s200, %s198
        %s202 = scalar_lea.vmem %s1, %s201
        %v203 = vld [vmem:[%s202] sm:$0x1]
        %v204 = vunpack.c.0.s8 %v203
        %v205 = vld [vmem:[%s171] sm:$0x3]
        %s206 = scalar_lea.vmem %s171, 2 [#allocation2]
        %v207 = vld [vmem:[%s206] sm:$0x3]
        %v208 = vmax.f32 %v205, %v207
        %s209 = scalar_lea.vmem %s171, 4 [#allocation2]
        %v210 = vld [vmem:[%s209] sm:$0x3]
        %v211 = vmax.f32 %v208, %v210
        %s212 = scalar_lea.vmem %s171, 6 [#allocation2]
        %v213 = vld [vmem:[%s212] sm:$0x3]
        %v214 = vmax.f32 %v211, %v213
        %v215 = vsub.f32 %v205, %v214
        %v216 = vmul.f32 %v215, 1.442695
        %v217 = vpow.pop %v216
        %v218 = vadd.f32 %v217, 0.0
        %vm219 = vcmp.eq.s32.totalorder %v204, 0
        %v220 = vsel %vm219, %v215, 0.0
        %v221 = vsel %vm219, %v217, 0.0
        %v222 = vsub.f32 %v207, %v214
        %v223 = vmul.f32 %v222, 1.442695
        %v224 = vpow.pop %v223
        %v225 = vadd.f32 %v218, %v224
        %vm226 = vcmp.eq.s32.totalorder %v204, 1
        %v227 = vsel %vm226, %v222, %v220
        %v228 = vsel %vm226, %v224, %v221
        %v229 = vsub.f32 %v210, %v214
        %v230 = vmul.f32 %v229, 1.442695
        %v231 = vpow.pop %v230
        %v232 = vadd.f32 %v225, %v231
        %vm233 = vcmp.eq.s32.totalorder %v204, 2
        %v234 = vsel %vm233, %v229, %v227
        %v235 = vsel %vm233, %v231, %v228
        %v236 = vsub.f32 %v213, %v214
        %v237 = vmul.f32 %v236, 1.442695
        %v238 = vpow.pop %v237
        %v239 = vadd.f32 %v232, %v238
        %vm240 = vcmp.eq.s32.totalorder %v204, 3
        %v241 = vsel %vm240, %v236, %v234
        %v242 = vsel %vm240, %v238, %v235
        %v243 = vlog2.pop %v239
        %v244 = vmul.f32 %v243, 0.6931472
        %v245 = vsub.f32 %v241, %v244
        %v246 = vrcp.pop %v239
        %v247 = vmul.f32 %v242, %v246
        %v248 = vsub.f32 1.0, %v247
        %v249 = vmul.f32 %v248, %v248
        %v250 = vsub.f32 0.0, %v249
        %v251 = vmul.f32 %v250, %v245
        %v252 = vlaneseq
        %v253 = vshrl.u32 %v252, 7
        %v254 = vlaneseq
        %v255 = vand.u32 %v254, 127
        %s256 = smul.u32 %s24, 256
        %v257 = vmul.u32 %v253, 128
        %v258 = vstv %s256
        %v259 = vadd.s32 %v258, %v257
        %v260 = vadd.s32 %v259, %v255
        %vm261 = vcmp.lt.s32.totalorder %v260, 256
        %v262 = vsel %vm261, %v251, 0.0
        %vm263 = vcmask 1041408
        %v264 = vsel %vm263, %v262, 0.0
        %v265 = vrot.slane %v264, 4
        %v266 = vadd.f32 %v264, %v265
        %v267 = vrot.slane %v266, 2
        %v268 = vadd.f32 %v266, %v267
        %v269 = vrot.slane %v268, 1
        %v270 = vadd.f32 %v268, %v269
        %271 = vst [vmem:[%s196] sm:$0x1] %v270
        %s272 = sand.u32 %s97, 1
        %s273 = scalar_lea.sflag [#allocation4], %s272
        %s274 = sand.u32 %s97, 1
        %s275 = scalar_lea.vmem [#allocation5], %s274
        // Predicated region
        $region33: #{tpu_custom_call.1} parent=27 // pred_check
          %p276 = pneg %p107
        $region34: #{tpu_custom_call.1} parent=27 // pred_check_branch
          %278 = sbr.rel (%p276) target = $region36
        $region35: #{tpu_custom_call.1} parent=27 // pred_region
          %s280 = ssub.s32 16, 16
          %281 = vsyncadd %s273, %s280
          %s282 = sadd.s32 %s24, %s23
          %s283 = smul.addr %s282, 16
          %s284 = scalar_lea.hbm %s2, %s283
          %s286 = sshll.u32 %s275, 4
          %s287 = int_to_ptr.vmem [resolvable:$true] %s286
          %289 = dma.vmem_to_hbm [thread:$0]  %s287, 16, %s284, %s273
        $region36: #{tpu_custom_call.1} parent=27 // pred_fallthru
          _
      $region28: #{tpu_custom_call.1} parent=5 // pred_fallthru
        _
      %p290 = scmp.le.s32.totalorder 2, %s14
      // Predicated region
      $region37: #{tpu_custom_call.1} parent=5 // pred_check
        %p291 = pneg %p290
      $region38: #{tpu_custom_call.1} parent=5 // pred_check_branch
        %293 = sbr.rel (%p291) target = $region40
      $region39: #{tpu_custom_call.1} parent=5 // pred_region
        %s294 = ssub.s32 %s14, 2
        // Predicated region
        $region41: #{tpu_custom_call.1} parent=39 // pred_check
          %p295 = pneg %p113
        $region42: #{tpu_custom_call.1} parent=39 // pred_check_branch
          %297 = sbr.rel (%p295) target = $region44
        $region43: #{tpu_custom_call.1} parent=39 // pred_region
          %s298 = sand.u32 %s98, 1
          %s299 = scalar_lea.sflag [#allocation4], %s298
          %s300 = sand.u32 %s98, 1
          %s301 = scalar_lea.vmem [#allocation5], %s300
          %302 = dma.done %s299, 16
        $region44: #{tpu_custom_call.1} parent=39 // pred_fallthru
          _
      $region40: #{tpu_custom_call.1} parent=5 // pred_fallthru
        _
    $region6: #{tpu_custom_call.1} parent=1 // loop_footer
      %s18 = sadd.s32 1, %s14
    $region7: #{tpu_custom_call.1} parent=1 // loop_footer_branch
      %13 = sbr.rel target = $region3
    $region8: #{tpu_custom_call.1} parent=1 // loop_exit
      _
    %303 = vsyncpa [#allocation3], 1
    %s304 = scalar_lea.sflag [#allocation3], 1
    %305 = vsyncpa %s304, 1
    %306 = vsyncpa [#allocation4], 1
    %s307 = scalar_lea.sflag [#allocation4], 1
    %308 = vsyncpa %s307, 1

</llo_original>
